<compile_context>
chip_gen: v6e
topology: v6e:2x2x1
jax: 0.10.0
libtpu: 0.0.40
codegen_flags: <defaults>
</compile_context>

<pallas_src>
import functools

import jax
import jax.numpy as jnp
from jax.experimental import pallas as pl
from jax.experimental.pallas import tpu as pltpu

BN_EPS = 1e-5

# Memory-space enum (name changed across JAX versions; prefer the current one).
_MEMSPACE = getattr(pltpu, "MemorySpace", None) or getattr(pltpu, "TPUMemorySpace")


# ----------------------------- chip-aware knobs -----------------------------

def _is_v7x_kind() -> bool:
    try:
        kind = jax.devices()[0].device_kind.lower()
    except Exception:
        return False
    return ("v7" in kind) or ("7x" in kind)


def _vmem_limit_bytes() -> int:
    """~112 MiB on 128-MiB parts (v5e/v6e), ~56 MiB on v7x (64 MiB physical)."""
    cap = None
    try:
        cap = int(getattr(pltpu.get_tpu_info(), "vmem_capacity_bytes", 0)) or None
    except Exception:
        cap = None
    if cap is None:
        cap = (64 if _is_v7x_kind() else 128) * 1024 * 1024
    return min(int(cap * 7 // 8), 112 * 1024 * 1024)


def _default_num_splits() -> int:
    """v7x has 2 TensorCores per chip: shard the hidden tiles across them via the
    'parallel' split axis.  Single TC elsewhere."""
    return 2 if _is_v7x_kind() else 1


def _pick_block_h(H, *, batch, d_in, d_out, w_bytes, vmem_limit):
    """Largest MXU-friendly hidden tile (>=256 so the 256-wide MXUs on v6e/v7x are
    fully fed) whose working set fits the VMEM budget; single tile as a fallback."""
    candidates = [th for th in (1024, 512, 256) if H % th == 0]
    if not candidates:
        return H                                  # tiny / irregular hidden dim
    for th in candidates:                         # largest first
        est = (batch * d_in * 4                   # resident x (f32 worst case)
               + 2 * d_in * th * w_bytes          # double-buffered w1 tile
               + 2 * th * d_out * w_bytes         # double-buffered w2 tile
               + 2 * batch * d_out * 4            # resident output block + writeback
               + 4 * batch * th * 4)              # f32 h / centered / act temporaries
        if est <= int(vmem_limit * 0.85):
            return th
    return candidates[-1]


# --------------------------------- kernel -----------------------------------

def projection_head_kernel(x_ref, w1_ref, gamma_ref, beta_ref, w2_ref, o_ref,
                           *, n_h_inner):
    s = pl.program_id(0)   # "parallel" split over groups of hidden tiles (v7x: one/TC)
    h = pl.program_id(1)   # "arbitrary": streams hidden tiles, carries the accumulator

    @pl.when(h == 0)
    def _init():
        o_ref[...] = jnp.zeros_like(o_ref)

    tile = s * n_h_inner + h                      # global hidden-tile index

    # ---- Linear 1 (bias folded away: a per-column constant is cancelled exactly by
    #      the BN mean subtraction).  bf16 casts happen in-kernel so f32 params are
    #      read from HBM once, with no wrapper-side convert round trip. ----
    x_bf = x_ref[...].astype(jnp.bfloat16)
    w1_bf = w1_ref[...].astype(jnp.bfloat16)
    hmat = jnp.dot(x_bf, w1_bf, preferred_element_type=jnp.float32)   # (B, TH) f32

    # ---- BatchNorm1d, training-mode biased batch stats, f32 math ----
    # Batch mean via a tiny MXU matmul (ones @ h) instead of an XLU tree-reduce, so the
    # cross-lane unit does not compete with the main vmatmul stream for the extended
    # slot; variance is the centered two-pass form (no E[h^2]-E[h]^2 cancellation).
    batch = hmat.shape[0]
    ones_row = jnp.ones((1, batch), jnp.float32)
    mean = jnp.dot(ones_row, hmat, preferred_element_type=jnp.float32) * (1.0 / batch)
    centered = hmat - mean                                            # (B, TH)
    var = jnp.mean(centered * centered, axis=0, keepdims=True)        # (1, TH)
    scale = gamma_ref[tile] * jax.lax.rsqrt(var + BN_EPS)             # (1, TH)
    h_act = jnp.maximum(centered * scale + beta_ref[tile], 0.0)       # affine + ReLU

    # ---- Linear 2 (bias=False): accumulate straight into the resident output block ----
    w2_bf = w2_ref[...].astype(jnp.bfloat16)
    o_ref[...] += jnp.dot(h_act.astype(jnp.bfloat16), w2_bf,
                          preferred_element_type=jnp.float32)[None, :, :]


# -------------------------------- wrapper -----------------------------------

def projection_head(x, w1, b1, gamma, beta, w2, *, block_h=None, num_splits=None):
    """Forward of Linear(bias) -> BatchNorm1d(train) -> ReLU -> Linear(no bias).

    x: (B, D_in); w1: (D_in, H); b1/gamma/beta: (H,); w2: (H, D_out).
    Params may be f32 or bf16; MXU operands are cast to bf16 inside the kernel.
    """
    B, D_in = x.shape
    H = w1.shape[1]
    D_out = w2.shape[1]
    del b1  # constant pre-BN shift is removed exactly by the batch-mean subtraction
    # (forward activation only; BN running_mean/running_var updates are not reproduced)

    vmem_limit = _vmem_limit_bytes()
    w_bytes = max(jnp.dtype(w1.dtype).itemsize, jnp.dtype(w2.dtype).itemsize)
    if block_h is None:
        block_h = _pick_block_h(H, batch=B, d_in=D_in, d_out=D_out,
                                w_bytes=w_bytes, vmem_limit=vmem_limit)
    assert H % block_h == 0, "hidden dim must be divisible by the hidden tile"
    n_h = H // block_h

    if num_splits is None:
        num_splits = _default_num_splits()
    num_splits = max(1, min(num_splits, n_h))
    while n_h % num_splits:           # keep the split exact
        num_splits -= 1
    n_h_inner = n_h // num_splits

    # gamma/beta: resident (n_h, 1, TH) f32 slabs, indexed per tile in-kernel — no
    # per-step DMA / semaphore pair for these tiny vectors.
    gamma_r = jnp.reshape(gamma.astype(jnp.float32), (n_h, 1, block_h))
    beta_r = jnp.reshape(beta.astype(jnp.float32), (n_h, 1, block_h))

    kernel = functools.partial(projection_head_kernel, n_h_inner=n_h_inner)

    resident = pl.BlockSpec(memory_space=_MEMSPACE.VMEM)  # single-buffered, DMA'd once
    # TODO(synk): for very large batches (B*D_in*4 >~ 16 MiB) on v7x, tile the batch
    # with a separate stats pass instead of keeping x fully resident in VMEM.
    # TODO(synk): add pipeline_mode=pl.Buffered(3) on the w1 spec for small-batch v6e
    # once the installed JAX honors BlockSpec.pipeline_mode in the Mosaic pipeline.
    partial_out = pl.pallas_call(
        kernel,
        out_shape=jax.ShapeDtypeStruct((num_splits, B, D_out), jnp.float32),
        grid_spec=pltpu.PrefetchScalarGridSpec(
            num_scalar_prefetch=0,
            grid=(num_splits, n_h_inner),
            in_specs=[
                resident,                                                             # x
                pl.BlockSpec((D_in, block_h), lambda s, h: (0, s * n_h_inner + h)),   # w1
                resident,                                                             # gamma
                resident,                                                             # beta
                pl.BlockSpec((block_h, D_out), lambda s, h: (s * n_h_inner + h, 0)),  # w2
            ],
            out_specs=pl.BlockSpec((1, B, D_out), lambda s, h: (s, 0, 0)),
        ),
        compiler_params=pltpu.CompilerParams(
            dimension_semantics=("parallel", "arbitrary"),
            vmem_limit_bytes=vmem_limit,
        ),
    )(x, w1, gamma_r, beta_r, w2)

    # Combine per-split partial sums (one per TensorCore on v7x): a (S, B, D_out)
    # -> (B, D_out) add, negligible next to the streamed weight traffic.
    return jnp.sum(partial_out, axis=0)


# ------------------------------- references ---------------------------------

def reference_matched(x, w1, gamma, beta, w2):
    """Same numerics as the kernel (bf16 MXU inputs, f32 BN, centered variance)."""
    h = jnp.dot(x.astype(jnp.bfloat16), w1.astype(jnp.bfloat16),
                preferred_element_type=jnp.float32)
    mean = jnp.mean(h, axis=0, keepdims=True)
    centered = h - mean
    var = jnp.mean(centered * centered, axis=0, keepdims=True)
    scale = jnp.reshape(gamma, (1, -1)) * jax.lax.rsqrt(var + BN_EPS)
    h_act = jnp.maximum(centered * scale + jnp.reshape(beta, (1, -1)), 0.0)
    return jnp.dot(h_act.astype(jnp.bfloat16), w2.astype(jnp.bfloat16),
                   preferred_element_type=jnp.float32)


def reference_f32(x, w1, b1, gamma, beta, w2):
    """Straight fp32 transcription of the PyTorch module (training-mode BN)."""
    h = x @ w1 + b1
    mean = jnp.mean(h, axis=0, keepdims=True)
    var = jnp.mean((h - mean) ** 2, axis=0, keepdims=True)
    h = (h - mean) / jnp.sqrt(var + BN_EPS) * gamma + beta
    h = jnp.maximum(h, 0.0)
    return h @ w2


if __name__ == "__main__":
    # Small, lane-dense shapes consistent with the module (real defaults: 2048/2048/128).
    batch, input_dim, hidden_dim, output_dim = 16, 128, 1024, 128

    key = jax.random.PRNGKey(0)
    k_x, k_w1, k_b1, k_g, k_b, k_w2 = jax.random.split(key, 6)

    x = jax.random.normal(k_x, (batch, input_dim), jnp.float32)
    w1 = jax.random.normal(k_w1, (input_dim, hidden_dim), jnp.float32) * (input_dim ** -0.5)
    b1 = jax.random.normal(k_b1, (hidden_dim,), jnp.float32) * 0.01
    gamma = 1.0 + 0.1 * jax.random.normal(k_g, (hidden_dim,), jnp.float32)
    beta = 0.05 * jax.random.normal(k_b, (hidden_dim,), jnp.float32)
    w2 = jax.random.normal(k_w2, (hidden_dim, output_dim), jnp.float32) * (hidden_dim ** -0.5)

    # Forced multi-tile + multi-split call: exercises per-split init, the H-axis
    # accumulation into the resident output block, and the partial-sum reduction.
    out = projection_head(x, w1, b1, gamma, beta, w2, block_h=256, num_splits=2)
    jax.block_until_ready(out)
    assert out.shape == (batch, output_dim)

    # Auto-tuned call (block_h / num_splits / VMEM budget picked from the local chip).
    out_auto = projection_head(x, w1, b1, gamma, beta, w2)
    jax.block_until_ready(out_auto)
    assert out_auto.shape == (batch, output_dim)

    ref_m = reference_matched(x, w1, gamma, beta, w2)
    ref32 = reference_f32(x, w1, b1, gamma, beta, w2)
    for o in (out, out_auto):
        assert jnp.allclose(o, ref_m, atol=2e-3, rtol=2e-3), \
            float(jnp.max(jnp.abs(o - ref_m)))
        assert jnp.allclose(o, ref32, atol=1e-1, rtol=1e-1), \
            float(jnp.max(jnp.abs(o - ref32)))

    print("KERNEL_OK")
</pallas_src>

<mosaic_0001>
module attributes {stable_mosaic.version = 11 : i64} {
  func.func @projection_head_kernel(%arg0: i32, %arg1: i32, %arg2: memref<16x128xf32, #tpu.memory_space<vmem>>, %arg3: memref<128x256xf32, #tpu.memory_space<vmem>>, %arg4: memref<4x1x256xf32, #tpu.memory_space<vmem>>, %arg5: memref<4x1x256xf32, #tpu.memory_space<vmem>>, %arg6: memref<256x128xf32, #tpu.memory_space<vmem>>, %arg7: memref<1x16x128xf32, #tpu.memory_space<vmem>>) attributes {dimension_semantics = [#tpu.dimension_semantics<parallel>, #tpu.dimension_semantics<arbitrary>], iteration_bounds = array<i64: 2, 2>, scalar_prefetch = 0 : i64, scratch_operands = 0 : i64, tpu.core_type = #tpu.core_type<tc>, window_params = [{pipeline_mode = #tpu.pipeline_mode<synchronous>, transform_indices = @transform_0, window_bounds = array<i64: 16, 128>}, {transform_indices = @transform_1, window_bounds = array<i64: 128, 256>}, {pipeline_mode = #tpu.pipeline_mode<synchronous>, transform_indices = @transform_2, window_bounds = array<i64: 4, 1, 256>}, {pipeline_mode = #tpu.pipeline_mode<synchronous>, transform_indices = @transform_3, window_bounds = array<i64: 4, 1, 256>}, {transform_indices = @transform_4, window_bounds = array<i64: 256, 128>}, {transform_indices = @transform_5, window_bounds = array<i64: 1, 16, 128>}]} {
    %c0_i32 = arith.constant 0 : i32
    %0 = arith.cmpi eq, %arg1, %c0_i32 : i32
    %1 = arith.extui %0 : i1 to i32
    %c0_i32_0 = arith.constant 0 : i32
    %2 = arith.cmpi ne, %1, %c0_i32_0 : i32
    scf.if %2 {
      %cst_24 = arith.constant 0.000000e+00 : f32
      %45 = vector.broadcast %cst_24 : f32 to vector<1x16x128xf32>
      %c0_25 = arith.constant 0 : index
      %c0_26 = arith.constant 0 : index
      %c0_27 = arith.constant 0 : index
      %46 = vector.load %arg7[%c0_25, %c0_26, %c0_27] : memref<1x16x128xf32, #tpu.memory_space<vmem>>, vector<1x16x128xf32>
      tpu.vector_store %arg7[%c0_25, %c0_26, %c0_27], %45 {strides = array<i32>} : memref<1x16x128xf32, #tpu.memory_space<vmem>>, vector<1x16x128xf32>,
    } else {
    }
    %c2_i32 = arith.constant 2 : i32
    %3 = arith.muli %arg0, %c2_i32 : i32
    %4 = arith.addi %3, %arg1 : i32
    %c0 = arith.constant 0 : index
    %c0_1 = arith.constant 0 : index
    %5 = vector.load %arg2[%c0, %c0_1] : memref<16x128xf32, #tpu.memory_space<vmem>>, vector<16x128xf32>
    %6 = arith.truncf %5 : vector<16x128xf32> to vector<16x128xbf16>
    %c0_2 = arith.constant 0 : index
    %c0_3 = arith.constant 0 : index
    %7 = vector.load %arg3[%c0_2, %c0_3] : memref<128x256xf32, #tpu.memory_space<vmem>>, vector<128x256xf32>
    %8 = arith.truncf %7 : vector<128x256xf32> to vector<128x256xbf16>
    %cst = arith.constant dense<0.000000e+00> : vector<16x256xf32>
    %9 = tpu.matmul %6, %8, %cst {dimension_numbers = #tpu.dot_dimension_numbers<[1], [0], [0], [1], [0, 0, 1, 1], [], []>} : vector<16x128xbf16>, vector<128x256xbf16>, vector<16x256xf32> -> vector<16x256xf32>
    %cst_4 = arith.constant 1.000000e+00 : f32
    %10 = vector.broadcast %cst_4 : f32 to vector<1x16xf32>
    %cst_5 = arith.constant dense<0.000000e+00> : vector<1x256xf32>
    %11 = tpu.matmul %10, %9, %cst_5 {dimension_numbers = #tpu.dot_dimension_numbers<[1], [0], [0], [1], [0, 0, 1, 1], [], []>} : vector<1x16xf32>, vector<16x256xf32>, vector<1x256xf32> -> vector<1x256xf32>
    %cst_6 = arith.constant 6.250000e-02 : f32
    %12 = vector.broadcast %cst_6 : f32 to vector<1x256xf32>
    %13 = arith.mulf %11, %12 : vector<1x256xf32>
    %14 = vector.broadcast %13 : vector<1x256xf32> to vector<16x256xf32>
    %15 = arith.subf %9, %14 : vector<16x256xf32>
    %16 = arith.mulf %15, %15 : vector<16x256xf32>
    %cst_7 = arith.constant dense<0.000000e+00> : vector<256xf32>
    %17 = vector.multi_reduction <add>, %16, %cst_7 [0] : vector<16x256xf32> to vector<256xf32>
    %18 = vector.shape_cast %17 : vector<256xf32> to vector<1x256xf32>
    %cst_8 = arith.constant 1.600000e+01 : f32
    %19 = vector.broadcast %cst_8 : f32 to vector<1x256xf32>
    %20 = arith.divf %18, %19 : vector<1x256xf32>
    %21 = arith.index_cast %4 : i32 to index
    %c0_9 = arith.constant 0 : index
    %c0_10 = arith.constant 0 : index
    %22 = vector.load %arg4[%21, %c0_9, %c0_10] : memref<4x1x256xf32, #tpu.memory_space<vmem>>, vector<1x1x256xf32>
    %23 = vector.shape_cast %22 : vector<1x1x256xf32> to vector<1x256xf32>
    %cst_11 = arith.constant 9.99999974E-6 : f32
    %24 = vector.broadcast %cst_11 : f32 to vector<1x256xf32>
    %25 = arith.addf %20, %24 : vector<1x256xf32>
    %26 = math.rsqrt %25 : vector<1x256xf32>
    %27 = arith.mulf %23, %26 : vector<1x256xf32>
    %28 = vector.broadcast %27 : vector<1x256xf32> to vector<16x256xf32>
    %29 = arith.mulf %15, %28 : vector<16x256xf32>
    %30 = arith.index_cast %4 : i32 to index
    %c0_12 = arith.constant 0 : index
    %c0_13 = arith.constant 0 : index
    %31 = vector.load %arg5[%30, %c0_12, %c0_13] : memref<4x1x256xf32, #tpu.memory_space<vmem>>, vector<1x1x256xf32>
    %32 = vector.shape_cast %31 : vector<1x1x256xf32> to vector<1x256xf32>
    %33 = vector.broadcast %32 : vector<1x256xf32> to vector<16x256xf32>
    %34 = arith.addf %29, %33 : vector<16x256xf32>
    %cst_14 = arith.constant 0.000000e+00 : f32
    %35 = vector.broadcast %cst_14 : f32 to vector<16x256xf32>
    %36 = arith.maximumf %34, %35 : vector<16x256xf32>
    %c0_15 = arith.constant 0 : index
    %c0_16 = arith.constant 0 : index
    %37 = vector.load %arg6[%c0_15, %c0_16] : memref<256x128xf32, #tpu.memory_space<vmem>>, vector<256x128xf32>
    %38 = arith.truncf %37 : vector<256x128xf32> to vector<256x128xbf16>
    %c0_17 = arith.constant 0 : index
    %c0_18 = arith.constant 0 : index
    %c0_19 = arith.constant 0 : index
    %39 = vector.load %arg7[%c0_17, %c0_18, %c0_19] : memref<1x16x128xf32, #tpu.memory_space<vmem>>, vector<1x16x128xf32>
    %40 = arith.truncf %36 : vector<16x256xf32> to vector<16x256xbf16>
    %cst_20 = arith.constant dense<0.000000e+00> : vector<16x128xf32>
    %41 = tpu.matmul %40, %38, %cst_20 {dimension_numbers = #tpu.dot_dimension_numbers<[1], [0], [0], [1], [0, 0, 1, 1], [], []>} : vector<16x256xbf16>, vector<256x128xbf16>, vector<16x128xf32> -> vector<16x128xf32>
    %42 = vector.shape_cast %41 : vector<16x128xf32> to vector<1x16x128xf32>
    %43 = arith.addf %39, %42 : vector<1x16x128xf32>
    %c0_21 = arith.constant 0 : index
    %c0_22 = arith.constant 0 : index
    %c0_23 = arith.constant 0 : index
    %44 = vector.load %arg7[%c0_21, %c0_22, %c0_23] : memref<1x16x128xf32, #tpu.memory_space<vmem>>, vector<1x16x128xf32>
    tpu.vector_store %arg7[%c0_21, %c0_22, %c0_23], %43 {strides = array<i32>} : memref<1x16x128xf32, #tpu.memory_space<vmem>>, vector<1x16x128xf32>,
    return
  }
  func.func @transform_0(%arg0: i32, %arg1: i32) -> (i32, i32) {
    %c0_i32 = arith.constant 0 : i32
    %c0_i32_0 = arith.constant 0 : i32
    %c0_i32_1 = arith.constant 0 : i32
    return %c0_i32, %c0_i32_0 : i32, i32
  }
  func.func @transform_1(%arg0: i32, %arg1: i32) -> (i32, i32) {
    %c2_i32 = arith.constant 2 : i32
    %0 = arith.muli %arg0, %c2_i32 : i32
    %1 = arith.addi %0, %arg1 : i32
    %c0_i32 = arith.constant 0 : i32
    %c0_i32_0 = arith.constant 0 : i32
    return %c0_i32, %1 : i32, i32
  }
  func.func @transform_2(%arg0: i32, %arg1: i32) -> (i32, i32, i32) {
    %c0_i32 = arith.constant 0 : i32
    %c0_i32_0 = arith.constant 0 : i32
    %c0_i32_1 = arith.constant 0 : i32
    %c0_i32_2 = arith.constant 0 : i32
    return %c0_i32, %c0_i32_0, %c0_i32_1 : i32, i32, i32
  }
  func.func @transform_3(%arg0: i32, %arg1: i32) -> (i32, i32, i32) {
    %c0_i32 = arith.constant 0 : i32
    %c0_i32_0 = arith.constant 0 : i32
    %c0_i32_1 = arith.constant 0 : i32
    %c0_i32_2 = arith.constant 0 : i32
    return %c0_i32, %c0_i32_0, %c0_i32_1 : i32, i32, i32
  }
  func.func @transform_4(%arg0: i32, %arg1: i32) -> (i32, i32) {
    %c2_i32 = arith.constant 2 : i32
    %0 = arith.muli %arg0, %c2_i32 : i32
    %1 = arith.addi %0, %arg1 : i32
    %c0_i32 = arith.constant 0 : i32
    %c0_i32_0 = arith.constant 0 : i32
    return %1, %c0_i32 : i32, i32
  }
  func.func @transform_5(%arg0: i32, %arg1: i32) -> (i32, i32, i32) {
    %c0_i32 = arith.constant 0 : i32
    %c0_i32_0 = arith.constant 0 : i32
    %c0_i32_1 = arith.constant 0 : i32
    return %arg0, %c0_i32, %c0_i32_0 : i32, i32, i32
  }
}

</mosaic_0001>

<llo_original>
// kernel: tpu_custom_call.1
$region0: #{tpu_custom_call.1}
  #allocation0 [shape = 'u32[]', space=smem, size = 0x4, offset = 0x4, fixed_abs, tag = 'smem constant byte address 0x4 - core index']
  #allocation1 [shape = 'u32[144,128]{1,0:T(1,128)}', space=vmem, size = 0x12000, scoped, tag = 'internal scratch']
  %s0 = inlined_call_operand.hbm [shape: f32[16,128], index: 0, kind: input, shape index: {}]
  %s1 = inlined_call_operand.hbm [shape: f32[128,1024], index: 1, kind: input, shape index: {}]
  %s2 = inlined_call_operand.hbm [shape: f32[4,1,256], index: 2, kind: input, shape index: {}]
  %s3 = inlined_call_operand.hbm [shape: f32[4,1,256], index: 3, kind: input, shape index: {}]
  %s4 = inlined_call_operand.hbm [shape: f32[1024,128], index: 4, kind: input, shape index: {}]
  %s5 = inlined_call_operand.hbm [shape: f32[2,16,128], index: 5, kind: output, shape index: {}]
  %s6 = sld [smem:[#allocation0]]
  $region77: #{tpu_custom_call.1} parent=0
    _
  %s8 = ssub.s32 1, %s6
  %s9 = scalar_select 0, %s8, %s6
  $region1: #{tpu_custom_call.1} parent=0
    #allocation2 [shape = 'u8[8192]{0}', space=vmem, size = 0x2000, scoped, tag = 'input window, operand 0, single buffered']
    #allocation3 [shape = 's32[2]{0}', space=sflag, size = 0x8, scoped, tag = 'scoped memory for tpu_custom_call.1']
    #allocation4 [shape = 's32[2]{0}', space=sflag, size = 0x8, scoped, tag = 'scoped memory for tpu_custom_call.1']
    #allocation5 [shape = 'u8[262144]{0}', space=vmem, size = 0x40000, scoped, tag = 'input window, operand 1']
    #allocation6 [shape = 's32[2]{0}', space=sflag, size = 0x8, scoped, tag = 'scoped memory for tpu_custom_call.1']
    #allocation7 [shape = 'u8[4096]{0}', space=vmem, size = 0x1000, scoped, tag = 'input window, operand 2, single buffered']
    #allocation8 [shape = 'u8[4096]{0}', space=vmem, size = 0x1000, scoped, tag = 'input window, operand 3, single buffered']
    #allocation9 [shape = 's32[1]{0}', space=sflag, size = 0x4, scoped, tag = 'scoped memory for tpu_custom_call.1']
    #allocation10 [shape = 'u8[262144]{0}', space=vmem, size = 0x40000, scoped, tag = 'input window, operand 4']
    #allocation11 [shape = 'u8[16384]{0}', space=vmem, size = 0x4000, scoped, tag = 'output window, operand 0']
    %10 = vsyncpa [#allocation3], 0
    %11 = vsyncpa [#allocation6], 0
    %s12 = scalar_lea.sflag [#allocation6], 1
    %13 = vsyncpa %s12, 0
    %14 = vsyncpa [#allocation9], 0
    %15 = vsyncpa [#allocation4], 0
    %s16 = scalar_lea.sflag [#allocation4], 1
    %17 = vsyncpa %s16, 0
    loop: start=0, step=1, limit=6
    $region2: #{tpu_custom_call.1} parent=1 // loop_pre_header
      _
    $region3: #{tpu_custom_call.1} parent=1 // loop_header
      %s19 = sphi 0, %s23
      %p20 = scmp.ge.s32.totalorder %s19, 6
      %s26 = sphi 0, %s38
      %s27 = sphi 0, %s34
      %s28 = sphi 0, %s26
      %s29 = sphi 0, %s27
      %s30 = sphi 0, %s28
      %s31 = sphi 0, %s29
      %s39 = sphi 0, %s39
      %s41 = sphi 0, %s39
      %s42 = sphi 0, %s41
      %s56 = sphi 0, %s42
      %s66 = sphi 0, %s68
      %s69 = sphi 0, %s66
      %s70 = sphi 0, %s69
      %s86 = sphi 0, %s70
      %s90 = sphi 0, %s90
      %s92 = sphi 0, %s90
      %s93 = sphi 0, %s92
      %s107 = sphi 0, %s93
      %s111 = sphi 0, %s111
      %s113 = sphi 0, %s111
      %s114 = sphi 0, %s113
      %s128 = sphi 0, %s114
      %s138 = sphi 0, %s140
      %s141 = sphi 0, %s138
      %s142 = sphi 0, %s141
      %s158 = sphi 0, %s142
      %s164 = sphi 0, %s166
      %s167 = sphi 0, %s164
      %s168 = sphi 0, %s167
      %s184 = sphi 0, %s168
    $region4: #{tpu_custom_call.1} parent=1 // loop_header_branch
      %22 = sbr.rel (%p20) target = $region8
    $region5: #{tpu_custom_call.1} parent=1 // loop_body
      %s24 = ssub.s32 %s19, 1
      %s25 = ssub.s32 %s19, 2
      %s32 = sadd.s32 1, %s27
      %p33 = scmp.ge.s32.totalorder %s32, 2
      %s34 = scalar_select %p33, 0, %s32
      %s35 = sadd.s32 1, %s26
      %s36 = scalar_select %p33, %s35, %s26
      %p37 = scmp.ge.s32.totalorder %s36, 2
      %s38 = scalar_select %p37, 0, %s36
      %s40 = sadd.s32 %s39, 1
      %p43 = scmp.eq.s32.totalorder %s19, 3
      %p44 = scmp.ne.s32.totalorder %s39, %s41
      %p45 = scmp.eq.s32.totalorder %s19, 0
      %p46 = por %p44, %p45
      %p47 = scmp.ne.s32.totalorder %s39, %s41
      %p48 = scmp.eq.s32.totalorder %s24, 3
      %p49 = por %p47, %p48
      %p50 = scmp.ne.s32.totalorder %s41, %s42
      %p51 = scmp.eq.s32.totalorder %s24, 0
      %p52 = por %p50, %p51
      %p53 = scmp.ne.s32.totalorder %s41, %s42
      %p54 = scmp.eq.s32.totalorder %s25, 3
      %p55 = por %p53, %p54
      %p57 = scmp.ne.s32.totalorder %s42, %s56
      %p58 = scmp.eq.s32.totalorder %s25, 0
      %p59 = por %p57, %p58
      %s60 = smul.u32 %s26, 2
      %s61 = sadd.s32 %s60, %s27
      %s62 = smul.u32 %s38, 2
      %s63 = sadd.s32 %s62, %s34
      %s64 = ssub.s32 %s61, %s63
      %p65 = scmp.eq.s32.totalorder %s64, 0
      %s67 = sadd.s32 %s66, 1
      %s68 = scalar_select %p65, %s66, %s67
      %p71 = pneg %p65
      %p72 = scmp.eq.s32.totalorder %s19, 3
      %p73 = por %p71, %p72
      %p74 = scmp.ne.s32.totalorder %s66, %s69
      %p75 = scmp.eq.s32.totalorder %s19, 0
      %p76 = por %p74, %p75
      %p77 = scmp.ne.s32.totalorder %s66, %s69
      %p78 = scmp.eq.s32.totalorder %s24, 3
      %p79 = por %p77, %p78
      %p80 = scmp.ne.s32.totalorder %s69, %s70
      %p81 = scmp.eq.s32.totalorder %s24, 0
      %p82 = por %p80, %p81
      %p83 = scmp.ne.s32.totalorder %s69, %s70
      %p84 = scmp.eq.s32.totalorder %s25, 3
      %p85 = por %p83, %p84
      %p87 = scmp.ne.s32.totalorder %s70, %s86
      %p88 = scmp.eq.s32.totalorder %s25, 0
      %p89 = por %p87, %p88
      %s91 = sadd.s32 %s90, 1
      %p94 = scmp.eq.s32.totalorder %s19, 3
      %p95 = scmp.ne.s32.totalorder %s90, %s92
      %p96 = scmp.eq.s32.totalorder %s19, 0
      %p97 = por %p95, %p96
      %p98 = scmp.ne.s32.totalorder %s90, %s92
      %p99 = scmp.eq.s32.totalorder %s24, 3
      %p100 = por %p98, %p99
      %p101 = scmp.ne.s32.totalorder %s92, %s93
      %p102 = scmp.eq.s32.totalorder %s24, 0
      %p103 = por %p101, %p102
      %p104 = scmp.ne.s32.totalorder %s92, %s93
      %p105 = scmp.eq.s32.totalorder %s25, 3
      %p106 = por %p104, %p105
      %p108 = scmp.ne.s32.totalorder %s93, %s107
      %p109 = scmp.eq.s32.totalorder %s25, 0
      %p110 = por %p108, %p109
      %s112 = sadd.s32 %s111, 1
      %p115 = scmp.eq.s32.totalorder %s19, 3
      %p116 = scmp.ne.s32.totalorder %s111, %s113
      %p117 = scmp.eq.s32.totalorder %s19, 0
      %p118 = por %p116, %p117
      %p119 = scmp.ne.s32.totalorder %s111, %s113
      %p120 = scmp.eq.s32.totalorder %s24, 3
      %p121 = por %p119, %p120
      %p122 = scmp.ne.s32.totalorder %s113, %s114
      %p123 = scmp.eq.s32.totalorder %s24, 0
      %p124 = por %p122, %p123
      %p125 = scmp.ne.s32.totalorder %s113, %s114
      %p126 = scmp.eq.s32.totalorder %s25, 3
      %p127 = por %p125, %p126
      %p129 = scmp.ne.s32.totalorder %s114, %s128
      %p130 = scmp.eq.s32.totalorder %s25, 0
      %p131 = por %p129, %p130
      %s132 = smul.u32 %s26, 2
      %s133 = sadd.s32 %s132, %s27
      %s134 = smul.u32 %s38, 2
      %s135 = sadd.s32 %s134, %s34
      %s136 = ssub.s32 %s133, %s135
      %p137 = scmp.eq.s32.totalorder %s136, 0
      %s139 = sadd.s32 %s138, 1
      %s140 = scalar_select %p137, %s138, %s139
      %p143 = pneg %p137
      %p144 = scmp.eq.s32.totalorder %s19, 3
      %p145 = por %p143, %p144
      %p146 = scmp.ne.s32.totalorder %s138, %s141
      %p147 = scmp.eq.s32.totalorder %s19, 0
      %p148 = por %p146, %p147
      %p149 = scmp.ne.s32.totalorder %s138, %s141
      %p150 = scmp.eq.s32.totalorder %s24, 3
      %p151 = por %p149, %p150
      %p152 = scmp.ne.s32.totalorder %s141, %s142
      %p153 = scmp.eq.s32.totalorder %s24, 0
      %p154 = por %p152, %p153
      %p155 = scmp.ne.s32.totalorder %s141, %s142
      %p156 = scmp.eq.s32.totalorder %s25, 3
      %p157 = por %p155, %p156
      %p159 = scmp.ne.s32.totalorder %s142, %s158
      %p160 = scmp.eq.s32.totalorder %s25, 0
      %p161 = por %p159, %p160
      %s162 = ssub.s32 %s26, %s38
      %p163 = scmp.eq.s32.totalorder %s162, 0
      %s165 = sadd.s32 %s164, 1
      %s166 = scalar_select %p163, %s164, %s165
      %p169 = pneg %p163
      %p170 = scmp.eq.s32.totalorder %s19, 3
      %p171 = por %p169, %p170
      %p172 = scmp.ne.s32.totalorder %s164, %s167
      %p173 = scmp.eq.s32.totalorder %s19, 0
      %p174 = por %p172, %p173
      %p175 = scmp.ne.s32.totalorder %s164, %s167
      %p176 = scmp.eq.s32.totalorder %s24, 3
      %p177 = por %p175, %p176
      %p178 = scmp.ne.s32.totalorder %s167, %s168
      %p179 = scmp.eq.s32.totalorder %s24, 0
      %p180 = por %p178, %p179
      %p181 = scmp.ne.s32.totalorder %s167, %s168
      %p182 = scmp.eq.s32.totalorder %s25, 3
      %p183 = por %p181, %p182
      %p185 = scmp.ne.s32.totalorder %s168, %s184
      %p186 = scmp.eq.s32.totalorder %s25, 0
      %p187 = por %p185, %p186
      %p188 = scmp.le.s32.totalorder 1, %s19
      %p189 = scmp.lt.s32.totalorder %s19, 5
      %p190 = pnand %p188, %p189
      %p191 = pneg %p190
      // Predicated region
      $region9: #{tpu_custom_call.1} parent=5 // pred_check
        _
      $region10: #{tpu_custom_call.1} parent=5 // pred_check_branch
        %193 = sbr.rel (%p190) target = $region12
      $region11: #{tpu_custom_call.1} parent=5 // pred_region
        %s194 = ssub.s32 %s19, 1
        // Predicated region
        $region13: #{tpu_custom_call.1} parent=11 // pred_check
          %p195 = pneg %p52
        $region14: #{tpu_custom_call.1} parent=11 // pred_check_branch
          %197 = sbr.rel (%p195) target = $region16
        $region15: #{tpu_custom_call.1} parent=11 // pred_region
          %s199 = ssub.s32 256, 256
          %200 = vsyncadd [#allocation3], %s199
          %s201 = sshll.u32 [#allocation2], 4
          %s202 = int_to_ptr.vmem [resolvable:$true] %s201
          %207 = dma.hbm_to_vmem [thread:$0]  %s0, 256, %s202, [#allocation3], 128, 128, 8
        $region16: #{tpu_custom_call.1} parent=11 // pred_fallthru
          _
        // Predicated region
        $region17: #{tpu_custom_call.1} parent=11 // pred_check
          %p208 = pneg %p103
        $region18: #{tpu_custom_call.1} parent=11 // pred_check_branch
          %210 = sbr.rel (%p208) target = $region20
        $region19: #{tpu_custom_call.1} parent=11 // pred_region
          %s212 = ssub.s32 128, 128
          %213 = vsyncadd [#allocation6], %s212
          %s214 = sshll.u32 [#allocation7], 4
          %s215 = int_to_ptr.vmem [resolvable:$true] %s214
          %220 = dma.hbm_to_vmem [thread:$0]  %s2, 128, %s215, [#allocation6], 32, 32, 2
        $region20: #{tpu_custom_call.1} parent=11 // pred_fallthru
          _
        // Predicated region
        $region21: #{tpu_custom_call.1} parent=11 // pred_check
          %p221 = pneg %p124
        $region22: #{tpu_custom_call.1} parent=11 // pred_check_branch
          %223 = sbr.rel (%p221) target = $region24
        $region23: #{tpu_custom_call.1} parent=11 // pred_region
          %s225 = ssub.s32 128, 128
          %226 = vsyncadd [#allocation9], %s225
          %s227 = sshll.u32 [#allocation8], 4
          %s228 = int_to_ptr.vmem [resolvable:$true] %s227
          %233 = dma.hbm_to_vmem [thread:$0]  %s3, 128, %s228, [#allocation9], 32, 32, 2
        $region24: #{tpu_custom_call.1} parent=11 // pred_fallthru
          _
      $region12: #{tpu_custom_call.1} parent=5 // pred_fallthru
        _
      %p234 = scmp.lt.s32.totalorder %s19, 4
      // Predicated region
      $region25: #{tpu_custom_call.1} parent=5 // pred_check
        %p235 = pneg %p234
      $region26: #{tpu_custom_call.1} parent=5 // pred_check_branch
        %237 = sbr.rel (%p235) target = $region28
      $region27: #{tpu_custom_call.1} parent=5 // pred_region
        // Predicated region
        $region29: #{tpu_custom_call.1} parent=27 // pred_check
          %p238 = pneg %p76
        $region30: #{tpu_custom_call.1} parent=27 // pred_check_branch
          %240 = sbr.rel (%p238) target = $region32
        $region31: #{tpu_custom_call.1} parent=27 // pred_region
          %s241 = sand.u32 %s19, 1
          %s242 = scalar_lea.sflag [#allocation6], %s241
          %s243 = sand.u32 %s66, 1
          %s244 = smul.addr %s243, 256
          %s245 = scalar_lea.vmem [#allocation5], %s244
          %s246 = smul.u32 %s26, 2
          %s247 = sadd.s32 %s246, %s27
          %s248 = smul.u32 2, %s247
          %s250 = ssub.s32 4096, 4096
          %251 = vsyncadd %s242, %s250
          %s252 = smul.addr %s248, 128
          %s253 = scalar_lea.hbm %s1, %s252
          %s254 = sshll.u32 %s245, 4
          %s255 = int_to_ptr.vmem [resolvable:$true] %s254
          %260 = dma.hbm_to_vmem [thread:$0]  %s253, 4096, %s255, %s242, 1024, 256, 16
        $region32: #{tpu_custom_call.1} parent=27 // pred_fallthru
          _
        // Predicated region
        $region33: #{tpu_custom_call.1} parent=27 // pred_check
          %p261 = pneg %p148
        $region34: #{tpu_custom_call.1} parent=27 // pred_check_branch
          %263 = sbr.rel (%p261) target = $region36
        $region35: #{tpu_custom_call.1} parent=27 // pred_region
          %s264 = sand.u32 %s19, 1
          %s265 = scalar_lea.sflag [#allocation3], %s264
          %s266 = sand.u32 %s138, 1
          %s267 = smul.addr %s266, 256
          %s268 = scalar_lea.vmem [#allocation10], %s267
          %s269 = smul.u32 %s26, 2
          %s270 = sadd.s32 %s269, %s27
          %s271 = smul.u32 32, %s270
          %s273 = ssub.s32 4096, 4096
          %274 = vsyncadd %s265, %s273
          %s275 = smul.addr %s271, 128
          %s276 = scalar_lea.hbm %s4, %s275
          %s277 = sshll.u32 %s268, 4
          %s278 = int_to_ptr.vmem [resolvable:$true] %s277
          %283 = dma.hbm_to_vmem [thread:$0]  %s276, 4096, %s278, %s265, 128, 128, 8
        $region36: #{tpu_custom_call.1} parent=27 // pred_fallthru
          _
      $region28: #{tpu_custom_call.1} parent=5 // pred_fallthru
        _
      %p284 = scmp.le.s32.totalorder 1, %s19
      %p285 = scmp.lt.s32.totalorder %s19, 5
      %p286 = pnand %p284, %p285
      %p287 = pneg %p286
      // Predicated region
      $region37: #{tpu_custom_call.1} parent=5 // pred_check
        _
      $region38: #{tpu_custom_call.1} parent=5 // pred_check_branch
        %289 = sbr.rel (%p286) target = $region40
      $region39: #{tpu_custom_call.1} parent=5 // pred_region
        %s290 = ssub.s32 %s19, 1
        // Predicated region
        $region41: #{tpu_custom_call.1} parent=39 // pred_check
          %p291 = pneg %p52
        $region42: #{tpu_custom_call.1} parent=39 // pred_check_branch
          %293 = sbr.rel (%p291) target = $region44
        $region43: #{tpu_custom_call.1} parent=39 // pred_region
          %294 = dma.done [#allocation3], 256
        $region44: #{tpu_custom_call.1} parent=39 // pred_fallthru
          _
        %s295 = sand.u32 %s24, 1
        %s296 = scalar_lea.sflag [#allocation6], %s295
        %s297 = sand.u32 %s69, 1
        %s298 = smul.addr %s297, 256
        %s299 = scalar_lea.vmem [#allocation5], %s298
        // Predicated region
        $region45: #{tpu_custom_call.1} parent=39 // pred_check
          %p300 = pneg %p82
        $region46: #{tpu_custom_call.1} parent=39 // pred_check_branch
          %302 = sbr.rel (%p300) target = $region48
        $region47: #{tpu_custom_call.1} parent=39 // pred_region
          %303 = dma.done %s296, 4096
        $region48: #{tpu_custom_call.1} parent=39 // pred_fallthru
          _
        // Predicated region
        $region49: #{tpu_custom_call.1} parent=39 // pred_check
          %p304 = pneg %p103
        $region50: #{tpu_custom_call.1} parent=39 // pred_check_branch
          %306 = sbr.rel (%p304) target = $region52
        $region51: #{tpu_custom_call.1} parent=39 // pred_region
          %307 = dma.done [#allocation6], 128
        $region52: #{tpu_custom_call.1} parent=39 // pred_fallthru
          _
        // Predicated region
        $region53: #{tpu_custom_call.1} parent=39 // pred_check
          %p308 = pneg %p124
        $region54: #{tpu_custom_call.1} parent=39 // pred_check_branch
          %310 = sbr.rel (%p308) target = $region56
        $region55: #{tpu_custom_call.1} parent=39 // pred_region
          %311 = dma.done [#allocation9], 128
        $region56: #{tpu_custom_call.1} parent=39 // pred_fallthru
          _
        %s312 = sand.u32 %s24, 1
        %s313 = scalar_lea.sflag [#allocation3], %s312
        %s314 = sand.u32 %s141, 1
        %s315 = smul.addr %s314, 256
        %s316 = scalar_lea.vmem [#allocation10], %s315
        // Predicated region
        $region57: #{tpu_custom_call.1} parent=39 // pred_check
          %p317 = pneg %p154
        $region58: #{tpu_custom_call.1} parent=39 // pred_check_branch
          %319 = sbr.rel (%p317) target = $region60
        $region59: #{tpu_custom_call.1} parent=39 // pred_region
          %320 = dma.done %s313, 4096
        $region60: #{tpu_custom_call.1} parent=39 // pred_fallthru
          _
        %p321 = pneg %p52
        %p322 = pneg %p49
        %s323 = sand.u32 %s24, 1
        %s324 = scalar_lea.sflag [#allocation6], %s323
        %s325 = sand.u32 %s69, 1
        %s326 = smul.addr %s325, 256
        %s327 = scalar_lea.vmem [#allocation5], %s326
        %p328 = pneg %p82
        %p329 = pneg %p79
        %p330 = pneg %p103
        %p331 = pneg %p100
        %p332 = pneg %p124
        %p333 = pneg %p121
        %s334 = sand.u32 %s24, 1
        %s335 = scalar_lea.sflag [#allocation3], %s334
        %s336 = sand.u32 %s141, 1
        %s337 = smul.addr %s336, 256
        %s338 = scalar_lea.vmem [#allocation10], %s337
        %p339 = pneg %p154
        %p340 = pneg %p151
        %p341 = pneg %p180
        %p342 = pneg %p177
        %s343 = sand.u32 %s167, 1
        %s344 = scalar_lea.sflag [#allocation4], %s343
        %s345 = sand.u32 %s167, 1
        %s346 = smul.addr %s345, 16
        %s347 = scalar_lea.vmem [#allocation11], %s346
        %s348 = smul.u32 %s28, 2
        %s349 = sadd.s32 %s348, %s29
        %s350 = smul.u32 2, %s349
        %s351 = smul.u32 %s28, 2
        %s352 = sadd.s32 %s351, %s29
        %s353 = smul.u32 32, %s352
        %p355 = scmp.eq.s32.totalorder %s29, 0
        // Predicated region
        $region61: #{tpu_custom_call.1} parent=39 // pred_check
          %p356 = pneg %p355
        $region62: #{tpu_custom_call.1} parent=39 // pred_check_branch
          %358 = sbr.rel (%p356) target = $region64
        $region63: #{tpu_custom_call.1} parent=39 // pred_region
          %359 = vst [vmem:[%s347] sm:$0xff] 0.0
          %360 = vst [vmem:[%s347 + $0x8] sm:$0xff] 0.0
        $region64: #{tpu_custom_call.1} parent=39 // pred_fallthru
          _
        %s361 = smul.u32 %s28, 2
        %s362 = sadd.s32 %s361, %s29
        %v363 = vld [vmem:[#allocation2] sm:$0xff]
        %v364 = vld [vmem:[#allocation2 + $0x8] sm:$0xff]
        %v365 = vpack.c.bf16 %v364, %v363
        %v366 = vld [vmem:[%s299] sm:$0xff]
        %v367 = vld [vmem:[%s299 + $0x8] sm:$0xff]
        %v368 = vld [vmem:[%s299 + $0x10] sm:$0xff]
        %v369 = vld [vmem:[%s299 + $0x18] sm:$0xff]
        %v370 = vld [vmem:[%s299 + $0x20] sm:$0xff]
        %v371 = vld [vmem:[%s299 + $0x28] sm:$0xff]
        %v372 = vld [vmem:[%s299 + $0x30] sm:$0xff]
        %v373 = vld [vmem:[%s299 + $0x38] sm:$0xff]
        %v374 = vld [vmem:[%s299 + $0x40] sm:$0xff]
        %v375 = vld [vmem:[%s299 + $0x48] sm:$0xff]
        %v376 = vld [vmem:[%s299 + $0x50] sm:$0xff]
        %v377 = vld [vmem:[%s299 + $0x58] sm:$0xff]
        %v378 = vld [vmem:[%s299 + $0x60] sm:$0xff]
        %v379 = vld [vmem:[%s299 + $0x68] sm:$0xff]
        %v380 = vld [vmem:[%s299 + $0x70] sm:$0xff]
        %v381 = vld [vmem:[%s299 + $0x78] sm:$0xff]
        %v382 = vld [vmem:[%s299 + $0x80] sm:$0xff]
        %v383 = vld [vmem:[%s299 + $0x88] sm:$0xff]
        %v384 = vld [vmem:[%s299 + $0x90] sm:$0xff]
        %v385 = vld [vmem:[%s299 + $0x98] sm:$0xff]
        %v386 = vld [vmem:[%s299 + $0xa0] sm:$0xff]
        %v387 = vld [vmem:[%s299 + $0xa8] sm:$0xff]
        %v388 = vld [vmem:[%s299 + $0xb0] sm:$0xff]
        %v389 = vld [vmem:[%s299 + $0xb8] sm:$0xff]
        %v390 = vld [vmem:[%s299 + $0xc0] sm:$0xff]
        %v391 = vld [vmem:[%s299 + $0xc8] sm:$0xff]
        %v392 = vld [vmem:[%s299 + $0xd0] sm:$0xff]
        %v393 = vld [vmem:[%s299 + $0xd8] sm:$0xff]
        %v394 = vld [vmem:[%s299 + $0xe0] sm:$0xff]
        %v395 = vld [vmem:[%s299 + $0xe8] sm:$0xff]
        %v396 = vld [vmem:[%s299 + $0xf0] sm:$0xff]
        %v397 = vld [vmem:[%s299 + $0xf8] sm:$0xff]
        %v398 = vpack.c.bf16 %v368, %v366
        %v399 = vpack.c.bf16 %v369, %v367
        %v400 = vpack.c.bf16 %v372, %v370
        %v401 = vpack.c.bf16 %v373, %v371
        %v402 = vpack.c.bf16 %v376, %v374
        %v403 = vpack.c.bf16 %v377, %v375
        %v404 = vpack.c.bf16 %v380, %v378
        %v405 = vpack.c.bf16 %v381, %v379
        %v406 = vpack.c.bf16 %v384, %v382
        %v407 = vpack.c.bf16 %v385, %v383
        %v408 = vpack.c.bf16 %v388, %v386
        %v409 = vpack.c.bf16 %v389, %v387
        %v410 = vpack.c.bf16 %v392, %v390
        %v411 = vpack.c.bf16 %v393, %v391
        %v412 = vpack.c.bf16 %v396, %v394
        %v413 = vpack.c.bf16 %v397, %v395
        %414 = vmatprep.subr.bf16.mxu0 %v413
        %415 = vmatpush1.bf16.msra.mxu0 %v412
        %416 = vmatprep.subr.bf16.mxu0 %v411
        %417 = vmatpush1.bf16.msra.mxu0 %v410
        %418 = vmatprep.subr.bf16.mxu0 %v409
        %419 = vmatpush1.bf16.msra.mxu0 %v408
        %420 = vmatprep.subr.bf16.mxu0 %v407
        %421 = vmatpush1.bf16.msra.mxu0 %v406
        %422 = vmatprep.subr.bf16.mxu0 %v405
        %423 = vmatpush1.bf16.msra.mxu0 %v404
        %424 = vmatprep.subr.bf16.mxu0 %v403
        %425 = vmatpush1.bf16.msra.mxu0 %v402
        %426 = vmatprep.subr.bf16.mxu0 %v401
        %427 = vmatpush1.bf16.msra.mxu0 %v400
        %428 = vmatprep.subr.bf16.mxu0 %v399
        %429 = vmatpush1.bf16.msra.mxu0 %v398
        %430 = vmatprep.subr.bf16.mxu0 0
        %431 = vmatpush2.bf16.msra.mxu0 0
        %432 = vmatprep.subr.bf16.mxu0 0
        %433 = vmatpush2.bf16.msra.mxu0 0
        %434 = vmatprep.subr.bf16.mxu0 0
        %435 = vmatpush2.bf16.msra.mxu0 0
        %436 = vmatprep.subr.bf16.mxu0 0
        %437 = vmatpush2.bf16.msra.mxu0 0
        %438 = vmatprep.subr.bf16.mxu0 0
        %439 = vmatpush2.bf16.msra.mxu0 0
        %440 = vmatprep.subr.bf16.mxu0 0
        %441 = vmatpush2.bf16.msra.mxu0 0
        %442 = vmatprep.subr.bf16.mxu0 0
        %443 = vmatpush2.bf16.msra.mxu0 0
        %444 = vmatprep.subr.bf16.mxu0 0
        %445 = vmatpush2.bf16.msra.mxu0 0
        %446 = vmatprep.mubr.bf16.mxu0 0
        %447 = vmatmul.mubr.bf16.gmra.mxu0 %v365
        %v448 = vpop.f32.mrf.mxu0
        %v449 = vadd.f32 0.0, %v448
        %v450 = vpop.f32.mrf.mxu0
        %v451 = vadd.f32 0.0, %v450
        %v452 = vpop.f32.mrf.mxu0
        %v453 = vadd.f32 0.0, %v452
        %v454 = vpop.f32.mrf.mxu0
        %v455 = vadd.f32 0.0, %v454
        %456 = vdwg.mxu0
        %vm457 = vcmask 130048
        %v459 = vsel %vm457, 1.0, 0
        %461 = vmatprep.subr.mxu0 0.0
        %462 = vmatpush1.msra.mxu0 0.0
        %463 = vmatprep.subr.mxu0 0.0
        %464 = vmatpush1.msra.mxu0 0.0
        %465 = vmatprep.subr.mxu0 0.0
        %466 = vmatpush1.msra.mxu0 0.0
        %467 = vmatprep.subr.mxu0 0.0
        %468 = vmatpush1.msra.mxu0 0.0
        %469 = vmatprep.subr.mxu0 0.0
        %470 = vmatpush1.msra.mxu0 0.0
        %471 = vmatprep.subr.mxu0 0.0
        %472 = vmatpush1.msra.mxu0 0.0
        %473 = vmatprep.subr.mxu0 0.0
        %474 = vmatpush1.msra.mxu0 0.0
        %475 = vmatprep.subr.mxu0 0.0
        %476 = vmatpush1.msra.mxu0 0.0
        %477 = vmatprep.subr.mxu0 0.0
        %478 = vmatpush1.msra.mxu0 0.0
        %479 = vmatprep.subr.mxu0 0.0
        %480 = vmatpush1.msra.mxu0 0.0
        %481 = vmatprep.subr.mxu0 0.0
        %482 = vmatpush1.msra.mxu0 0.0
        %483 = vmatprep.subr.mxu0 0.0
        %484 = vmatpush1.msra.mxu0 0.0
        %485 = vmatprep.subr.mxu0 0.0
        %486 = vmatpush1.msra.mxu0 0.0
        %487 = vmatprep.subr.mxu0 0.0
        %488 = vmatpush1.msra.mxu0 0.0
        %489 = vmatprep.subr.mxu0 %v455
        %490 = vmatpush1.msra.mxu0 %v453
        %491 = vmatprep.subr.mxu0 %v451
        %492 = vmatpush1.msra.mxu0 %v449
        %493 = vmatprep.subr.mxu0 0.0
        %494 = vmatpush2.msra.mxu0 0.0
        %495 = vmatprep.subr.mxu0 0.0
        %496 = vmatpush2.msra.mxu0 0.0
        %497 = vmatprep.subr.mxu0 0.0
        %498 = vmatpush2.msra.mxu0 0.0
        %499 = vmatprep.subr.mxu0 0.0
        %500 = vmatpush2.msra.mxu0 0.0
        %501 = vmatprep.subr.mxu0 0.0
        %502 = vmatpush2.msra.mxu0 0.0
        %503 = vmatprep.subr.mxu0 0.0
        %504 = vmatpush2.msra.mxu0 0.0
        %505 = vmatprep.subr.mxu0 0.0
        %506 = vmatpush2.msra.mxu0 0.0
        %507 = vmatprep.subr.mxu0 0.0
        %508 = vmatpush2.msra.mxu0 0.0
        %509 = vmatprep.subr.mxu0 0.0
        %510 = vmatpush2.msra.mxu0 0.0
        %511 = vmatprep.subr.mxu0 0.0
        %512 = vmatpush2.msra.mxu0 0.0
        %513 = vmatprep.subr.mxu0 0.0
        %514 = vmatpush2.msra.mxu0 0.0
        %515 = vmatprep.subr.mxu0 0.0
        %516 = vmatpush2.msra.mxu0 0.0
        %517 = vmatprep.subr.mxu0 0.0
        %518 = vmatpush2.msra.mxu0 0.0
        %519 = vmatprep.subr.mxu0 0.0
        %520 = vmatpush2.msra.mxu0 0.0
        %521 = vmatprep.subr.mxu0 0.0
        %522 = vmatpush2.msra.mxu0 0.0
        %523 = vmatprep.subr.mxu0 0.0
        %524 = vmatpush2.msra.mxu0 0.0
        %525 = vmatprep.mubr.f32.mxu0 0.0
        %526 = vmatmul.mubr.f32.gmra.mxu0 %v459
        %v527 = vpop.f32.mrf.mxu0
        %v528 = vadd.f32 0.0, %v527
        %v529 = vpop.f32.mrf.mxu0
        %v530 = vadd.f32 0.0, %v529
        %531 = vdwg.mxu0
        %v532 = vmul.f32 %v528, 0.0625
        %v533 = vmul.f32 %v530, 0.0625
        %v534 = vlaneseq
        %v535 = vshrl.u32 %v534, 7
        %v536 = vsub.s32 0, %v535
        %v537 = vrot.slane %v532, %v536
        %v538 = vlaneseq
        %v539 = vshrl.u32 %v538, 7
        %v540 = vsub.s32 0, %v539
        %v541 = vrot.slane %v533, %v540
        %v542 = vsub.f32 %v449, %v537
        %v543 = vsub.f32 %v451, %v541
        %v544 = vsub.f32 %v453, %v537
        %v545 = vsub.f32 %v455, %v541
        %v546 = vmul.f32 %v542, %v542
        %v547 = vmul.f32 %v543, %v543
        %v548 = vmul.f32 %v544, %v544
        %v549 = vmul.f32 %v545, %v545
        %v550 = vadd.f32 %v546, %v548
        %v551 = vrot.slane %v550, 4
        %v552 = vadd.f32 %v550, %v551
        %v553 = vrot.slane %v552, 2
        %v554 = vadd.f32 %v552, %v553
        %v555 = vrot.slane %v554, 1
        %v556 = vadd.f32 %v554, %v555
        %v557 = vadd.f32 %v547, %v549
        %v558 = vrot.slane %v557, 4
        %v559 = vadd.f32 %v557, %v558
        %v560 = vrot.slane %v559, 2
        %v561 = vadd.f32 %v559, %v560
        %v562 = vrot.slane %v561, 1
        %v563 = vadd.f32 %v561, %v562
        %v564 = vrcp.pop 16.0
        %v565 = vmul.f32 %v556, %v564
        %v566 = vmul.f32 %v563, %v564
        %s567 = smul.u32 %s362, 2
        %s568 = scalar_lea.vmem [#allocation7], %s567
        %v569 = vld [vmem:[%s568] sm:$0x3]
        %v570 = vadd.f32 %v565, 1e-05
        %v571 = vadd.f32 %v566, 1e-05
        %v572 = vrsqrt.pop %v570
        %v573 = vrsqrt.pop %v571
        %v576 = vcombine.low %v572, %v573
        %v578 = vunpack.c.l.s4 1966171168
        %v579 = vunpack.c.0.s8 %v578
        %v580 = vlaneseq
        %v581 = vshrl.u32 %v580, 7
        %v582 = vsub.s32 %v579, %v581
        %v583 = vrot.slane %v576, %v582
        %v585 = vunpack.c.l.s4 1966171168
        %v586 = vunpack.c.0.s8 %v585
        %v587 = vlaneseq
        %v588 = vshrl.u32 %v587, 7
        %v589 = vsub.s32 %v586, %v588
        %v590 = vrot.slane %v583, %v589
        %v592 = vmul.f32 %v569, %v590
        %v594 = vlaneseq
        %v595 = vshrl.u32 %v594, 7
        %v596 = vsub.s32 0, %v595
        %v597 = vrot.slane %v592, %v596
        %v598 = vlaneseq
        %v599 = vshrl.u32 %v598, 7
        %v600 = vsub.s32 1, %v599
        %v601 = vrot.slane %v592, %v600
        %v604 = vmul.f32 %v542, %v597
        %v605 = vmul.f32 %v543, %v601
        %v606 = vmul.f32 %v544, %v597
        %v607 = vmul.f32 %v545, %v601
        %s608 = scalar_lea.vmem [#allocation8], %s567
        %v609 = vld [vmem:[%s608] sm:$0x3]
        %v611 = vlaneseq
        %v612 = vshrl.u32 %v611, 7
        %v613 = vsub.s32 0, %v612
        %v614 = vrot.slane %v609, %v613
        %v615 = vlaneseq
        %v616 = vshrl.u32 %v615, 7
        %v617 = vsub.s32 1, %v616
        %v618 = vrot.slane %v609, %v617
        %v621 = vadd.f32 %v604, %v614
        %v622 = vadd.f32 %v605, %v618
        %v623 = vadd.f32 %v606, %v614
        %v624 = vadd.f32 %v607, %v618
        %v625 = vmax.f32 %v621, 0.0
        %v626 = vmax.f32 %v622, 0.0
        %v627 = vmax.f32 %v623, 0.0
        %v628 = vmax.f32 %v624, 0.0
        %v629 = vld [vmem:[%s316] sm:$0xff]
        %v630 = vld [vmem:[%s316 + $0x8] sm:$0xff]
        %v631 = vld [vmem:[%s316 + $0x10] sm:$0xff]
        %v632 = vld [vmem:[%s316 + $0x18] sm:$0xff]
        %v633 = vld [vmem:[%s316 + $0x20] sm:$0xff]
        %v634 = vld [vmem:[%s316 + $0x28] sm:$0xff]
        %v635 = vld [vmem:[%s316 + $0x30] sm:$0xff]
        %v636 = vld [vmem:[%s316 + $0x38] sm:$0xff]
        %v637 = vld [vmem:[%s316 + $0x40] sm:$0xff]
        %v638 = vld [vmem:[%s316 + $0x48] sm:$0xff]
        %v639 = vld [vmem:[%s316 + $0x50] sm:$0xff]
        %v640 = vld [vmem:[%s316 + $0x58] sm:$0xff]
        %v641 = vld [vmem:[%s316 + $0x60] sm:$0xff]
        %v642 = vld [vmem:[%s316 + $0x68] sm:$0xff]
        %v643 = vld [vmem:[%s316 + $0x70] sm:$0xff]
        %v644 = vld [vmem:[%s316 + $0x78] sm:$0xff]
        %v645 = vld [vmem:[%s316 + $0x80] sm:$0xff]
        %v646 = vld [vmem:[%s316 + $0x88] sm:$0xff]
        %v647 = vld [vmem:[%s316 + $0x90] sm:$0xff]
        %v648 = vld [vmem:[%s316 + $0x98] sm:$0xff]
        %v649 = vld [vmem:[%s316 + $0xa0] sm:$0xff]
        %v650 = vld [vmem:[%s316 + $0xa8] sm:$0xff]
        %v651 = vld [vmem:[%s316 + $0xb0] sm:$0xff]
        %v652 = vld [vmem:[%s316 + $0xb8] sm:$0xff]
        %v653 = vld [vmem:[%s316 + $0xc0] sm:$0xff]
        %v654 = vld [vmem:[%s316 + $0xc8] sm:$0xff]
        %v655 = vld [vmem:[%s316 + $0xd0] sm:$0xff]
        %v656 = vld [vmem:[%s316 + $0xd8] sm:$0xff]
        %v657 = vld [vmem:[%s316 + $0xe0] sm:$0xff]
        %v658 = vld [vmem:[%s316 + $0xe8] sm:$0xff]
        %v659 = vld [vmem:[%s316 + $0xf0] sm:$0xff]
        %v660 = vld [vmem:[%s316 + $0xf8] sm:$0xff]
        %v661 = vpack.c.bf16 %v630, %v629
        %v662 = vpack.c.bf16 %v632, %v631
        %v663 = vpack.c.bf16 %v634, %v633
        %v664 = vpack.c.bf16 %v636, %v635
        %v665 = vpack.c.bf16 %v638, %v637
        %v666 = vpack.c.bf16 %v640, %v639
        %v667 = vpack.c.bf16 %v642, %v641
        %v668 = vpack.c.bf16 %v644, %v643
        %v669 = vpack.c.bf16 %v646, %v645
        %v670 = vpack.c.bf16 %v648, %v647
        %v671 = vpack.c.bf16 %v650, %v649
        %v672 = vpack.c.bf16 %v652, %v651
        %v673 = vpack.c.bf16 %v654, %v653
        %v674 = vpack.c.bf16 %v656, %v655
        %v675 = vpack.c.bf16 %v658, %v657
        %v676 = vpack.c.bf16 %v660, %v659
        %v677 = vld [vmem:[%s347] sm:$0xff]
        %v678 = vld [vmem:[%s347 + $0x8] sm:$0xff]
        %v679 = vpack.c.bf16 %v627, %v625
        %v680 = vpack.c.bf16 %v628, %v626
        %681 = vmatprep.subr.bf16.mxu0 0
        %682 = vmatpush1.bf16.msra.mxu0 %v668
        %683 = vmatprep.subr.bf16.mxu0 0
        %684 = vmatpush1.bf16.msra.mxu0 %v667
        %685 = vmatprep.subr.bf16.mxu0 0
        %686 = vmatpush1.bf16.msra.mxu0 %v666
        %687 = vmatprep.subr.bf16.mxu0 0
        %688 = vmatpush1.bf16.msra.mxu0 %v665
        %689 = vmatprep.subr.bf16.mxu0 0
        %690 = vmatpush1.bf16.msra.mxu0 %v664
        %691 = vmatprep.subr.bf16.mxu0 0
        %692 = vmatpush1.bf16.msra.mxu0 %v663
        %693 = vmatprep.subr.bf16.mxu0 0
        %694 = vmatpush1.bf16.msra.mxu0 %v662
        %695 = vmatprep.subr.bf16.mxu0 0
        %696 = vmatpush1.bf16.msra.mxu0 %v661
        %697 = vmatprep.subr.bf16.mxu0 0
        %698 = vmatpush2.bf16.msra.mxu0 %v676
        %699 = vmatprep.subr.bf16.mxu0 0
        %700 = vmatpush2.bf16.msra.mxu0 %v675
        %701 = vmatprep.subr.bf16.mxu0 0
        %702 = vmatpush2.bf16.msra.mxu0 %v674
        %703 = vmatprep.subr.bf16.mxu0 0
        %704 = vmatpush2.bf16.msra.mxu0 %v673
        %705 = vmatprep.subr.bf16.mxu0 0
        %706 = vmatpush2.bf16.msra.mxu0 %v672
        %707 = vmatprep.subr.bf16.mxu0 0
        %708 = vmatpush2.bf16.msra.mxu0 %v671
        %709 = vmatprep.subr.bf16.mxu0 0
        %710 = vmatpush2.bf16.msra.mxu0 %v670
        %711 = vmatprep.subr.bf16.mxu0 0
        %712 = vmatpush2.bf16.msra.mxu0 %v669
        %713 = vmatprep.mubr.bf16.mxu0 %v680
        %714 = vmatmul.mubr.bf16.gmra.mxu0 %v679
        %v715 = vpop.f32.mrf.mxu0
        %v716 = vadd.f32 0.0, %v715
        %v717 = vpop.f32.mrf.mxu0
        %v718 = vpop.f32.mrf.mxu0
        %v719 = vadd.f32 0.0, %v718
        %v720 = vpop.f32.mrf.mxu0
        %721 = vdwg.mxu0
        %v722 = vadd.f32 %v677, %v716
        %v723 = vadd.f32 %v678, %v719
        %724 = vst [vmem:[%s347] sm:$0xff] %v722
        %725 = vst [vmem:[%s347 + $0x8] sm:$0xff] %v723
        %s726 = sand.u32 %s167, 1
        %s727 = scalar_lea.sflag [#allocation4], %s726
        %s728 = sand.u32 %s167, 1
        %s729 = smul.addr %s728, 16
        %s730 = scalar_lea.vmem [#allocation11], %s729
        // Predicated region
        $region65: #{tpu_custom_call.1} parent=39 // pred_check
          %p731 = pneg %p177
        $region66: #{tpu_custom_call.1} parent=39 // pred_check_branch
          %733 = sbr.rel (%p731) target = $region68
        $region67: #{tpu_custom_call.1} parent=39 // pred_region
          %s735 = ssub.s32 256, 256
          %736 = vsyncadd %s727, %s735
          %s737 = smul.addr %s28, 2
          %s738 = smul.addr %s737, 128
          %s739 = scalar_lea.hbm %s5, %s738
          %s740 = sshll.u32 %s730, 4
          %s741 = int_to_ptr.vmem [resolvable:$true] %s740
          %746 = dma.vmem_to_hbm [thread:$0]  %s741, 256, %s739, %s727, 128, 128, 8
        $region68: #{tpu_custom_call.1} parent=39 // pred_fallthru
          _
      $region40: #{tpu_custom_call.1} parent=5 // pred_fallthru
        _
      %p747 = scmp.le.s32.totalorder 2, %s19
      // Predicated region
      $region69: #{tpu_custom_call.1} parent=5 // pred_check
        %p748 = pneg %p747
      $region70: #{tpu_custom_call.1} parent=5 // pred_check_branch
        %750 = sbr.rel (%p748) target = $region72
      $region71: #{tpu_custom_call.1} parent=5 // pred_region
        %s751 = ssub.s32 %s19, 2
        // Predicated region
        $region73: #{tpu_custom_call.1} parent=71 // pred_check
          %p752 = pneg %p183
        $region74: #{tpu_custom_call.1} parent=71 // pred_check_branch
          %754 = sbr.rel (%p752) target = $region76
        $region75: #{tpu_custom_call.1} parent=71 // pred_region
          %s755 = sand.u32 %s168, 1
          %s756 = scalar_lea.sflag [#allocation4], %s755
          %s757 = sand.u32 %s168, 1
          %s758 = smul.addr %s757, 16
          %s759 = scalar_lea.vmem [#allocation11], %s758
          %760 = dma.done %s756, 256
        $region76: #{tpu_custom_call.1} parent=71 // pred_fallthru
          _
      $region72: #{tpu_custom_call.1} parent=5 // pred_fallthru
        _
    $region6: #{tpu_custom_call.1} parent=1 // loop_footer
      %s23 = sadd.s32 1, %s19
    $region7: #{tpu_custom_call.1} parent=1 // loop_footer_branch
      %18 = sbr.rel target = $region3
    $region8: #{tpu_custom_call.1} parent=1 // loop_exit
      _
    %761 = vsyncpa [#allocation3], 1
    %s762 = scalar_lea.sflag [#allocation3], 1
    %763 = vsyncpa %s762, 1
    %764 = vsyncpa [#allocation6], 1
    %s765 = scalar_lea.sflag [#allocation6], 1
    %766 = vsyncpa %s765, 1
    %767 = vsyncpa [#allocation9], 1
    %768 = vsyncpa [#allocation4], 1
    %s769 = scalar_lea.sflag [#allocation4], 1
    %770 = vsyncpa %s769, 1

</llo_original>
